<compile_context>
chip_gen: v7x
topology: tpu7x:2x2x1
jax: 0.10.0
libtpu: 0.0.40
codegen_flags: <defaults>
</compile_context>

<pallas_src>
import functools

import jax
import jax.numpy as jnp
from jax.experimental import pallas as pl
from jax.experimental.pallas import tpu as pltpu

_MiB = 1024 * 1024


def _layernorm_kernel(x_ref, a_ref, b_ref, o_ref, *, eps, feat):
    x = x_ref[...].astype(jnp.float32)                       # (T, F)

    mean = jnp.sum(x, axis=-1, keepdims=True) * (1.0 / feat)
    diff = x - mean

    # torch.std(): unbiased (N-1) variance; eps added to the std, not the var.
    # (feat == 1 yields NaN, same as torch.)
    var = jnp.sum(diff * diff, axis=-1, keepdims=True) / jnp.float32(feat - 1)
    inv = pl.reciprocal(jnp.sqrt(var) + eps)                 # per-row (T, 1)

    a = a_ref[...].astype(jnp.float32)                       # (1, F)
    b = b_ref[...].astype(jnp.float32)                       # (1, F)
    o_ref[...] = ((diff * inv) * a + b).astype(o_ref.dtype)


def _chip_params():
    """Returns (tile budget bytes, vmem-limit cap bytes, has_two_tensorcores)."""
    kind = ""
    try:
        kind = jax.devices()[0].device_kind.lower()
    except Exception:
        pass
    if "v7" in kind:
        # v7x: 64 MiB VMEM per TensorCore, 2 TCs share the parallel grid axis.
        return 24 * _MiB, 48 * _MiB, True
    if "v5" in kind or "v6" in kind:
        # v5e/v6e: 128 MiB VMEM, single TensorCore.
        return 48 * _MiB, 96 * _MiB, False
    # Unknown generation: conservative values that fit the smallest VMEM part.
    return 24 * _MiB, 48 * _MiB, False


def _auto_tile_rows(rows, feat_pad, itemsize, pack, budget, two_tc):
    # Per-row VMEM working set: in + out tiles double-buffered (4 copies at the
    # input dtype) plus ~3 f32 temporaries the kernel may materialize.
    per_row = feat_pad * (4 * itemsize + 3 * 4)
    tile = max(pack, budget // max(per_row, 1))
    tile = min(tile, 2048)                     # diminishing returns past ~2K rows
    rows_up = pl.cdiv(rows, pack) * pack
    tile = min(tile, rows_up)                  # never exceed the real work
    tile = max(pack, (tile // pack) * pack)    # multiple of the sublane pack

    if two_tc and rows_up > pack:
        # v7x only: aim for an even grid-step count (and >= 8 steps when there
        # is enough work) so the two TensorCores get equal row shares.
        want_steps = min(8, rows_up // pack)
        t = tile
        while t > pack:
            steps = pl.cdiv(rows_up, t)
            if steps >= want_steps and steps % 2 == 0:
                break
            t -= pack
        tile = t
    return int(tile)


def layer_norm(x, a_2, b_2, eps=1e-6, *, tile_rows=None):
    """LayerNorm over the last axis of x. x: (..., F); a_2, b_2: (F,)."""
    orig_shape = x.shape
    feat = orig_shape[-1]
    x2d = x.reshape(-1, feat)
    rows = x2d.shape[0]
    a2d = a_2.reshape(1, feat)
    b2d = b_2.reshape(1, feat)

    itemsize = jnp.dtype(x.dtype).itemsize
    pack = max(8, 32 // itemsize)              # 8 f32, 16 bf16, 32 int8/fp8
    feat_pad = pl.cdiv(feat, 128) * 128        # VMEM-layout width (sizing only)

    budget, limit_cap, two_tc = _chip_params()

    if tile_rows is None:
        tile_rows = _auto_tile_rows(rows, feat_pad, itemsize, pack, budget, two_tc)
    else:
        tile_rows = max(pack, pl.cdiv(int(tile_rows), pack) * pack)

    grid_rows = pl.cdiv(rows, tile_rows)       # ragged last block; no row padding

    # Size the scoped-VMEM limit to the actual working set; never clamp it
    # below what the chosen tile needs (robust for user-supplied tile_rows).
    tile_bytes = tile_rows * feat_pad * itemsize
    needed = (4 * tile_bytes                   # in + out, double-buffered
              + 3 * tile_rows * feat_pad * 4   # f32 temporaries
              + 4 * feat_pad * 4               # a / b (double-buffered)
              + (1 << 20))                     # margin
    vmem_limit = int(min(max(needed, 32 * _MiB), limit_cap))
    vmem_limit = int(max(vmem_limit, needed))

    kernel = functools.partial(_layernorm_kernel, eps=float(eps), feat=feat)

    out = pl.pallas_call(
        kernel,
        out_shape=jax.ShapeDtypeStruct((rows, feat), x.dtype),
        grid_spec=pltpu.PrefetchScalarGridSpec(
            num_scalar_prefetch=0,
            grid=(grid_rows,),
            in_specs=[
                pl.BlockSpec((tile_rows, feat), lambda i: (i, 0)),
                pl.BlockSpec((1, feat), lambda i: (0, 0)),
                pl.BlockSpec((1, feat), lambda i: (0, 0)),
            ],
            out_specs=pl.BlockSpec((tile_rows, feat), lambda i: (i, 0)),
        ),
        compiler_params=pltpu.CompilerParams(
            dimension_semantics=("parallel",),
            vmem_limit_bytes=vmem_limit,
        ),
    )(x2d, a2d, b2d)

    return out.reshape(orig_shape)


if __name__ == "__main__":
    batch, seq, features = 2, 8, 32
    key = jax.random.PRNGKey(0)
    x = jax.random.normal(key, (batch, seq, features), dtype=jnp.float32)

    # Matches nn.Parameter(torch.ones/zeros(features)).
    a_2 = jnp.ones((features,), dtype=jnp.float32)
    b_2 = jnp.zeros((features,), dtype=jnp.float32)

    out = layer_norm(x, a_2, b_2, eps=1e-6)
    out = jax.block_until_ready(out)

    # Pure-JAX reference (same unbiased-std + eps-on-std semantics).
    mean = jnp.mean(x, axis=-1, keepdims=True)
    diff = x - mean
    std = jnp.sqrt(jnp.sum(diff * diff, axis=-1, keepdims=True) / (features - 1))
    ref = a_2 * diff / (std + 1e-6) + b_2
    assert jnp.allclose(out, ref, atol=1e-5, rtol=1e-5), (
        float(jnp.max(jnp.abs(out - ref))))

    print("KERNEL_OK")
</pallas_src>

<mosaic_0001>
module attributes {stable_mosaic.version = 11 : i64} {
  func.func @_layernorm_kernel(%arg0: i32, %arg1: memref<16x32xf32, #tpu.memory_space<vmem>>, %arg2: memref<1x32xf32, #tpu.memory_space<vmem>>, %arg3: memref<1x32xf32, #tpu.memory_space<vmem>>, %arg4: memref<16x32xf32, #tpu.memory_space<vmem>>) attributes {dimension_semantics = [#tpu.dimension_semantics<parallel>], iteration_bounds = array<i64: 1>, scalar_prefetch = 0 : i64, scratch_operands = 0 : i64, tpu.core_type = #tpu.core_type<tc>, window_params = [{transform_indices = @transform_0, window_bounds = array<i64: 16, 32>}, {pipeline_mode = #tpu.pipeline_mode<synchronous>, transform_indices = @transform_1, window_bounds = array<i64: 1, 32>}, {pipeline_mode = #tpu.pipeline_mode<synchronous>, transform_indices = @transform_2, window_bounds = array<i64: 1, 32>}, {transform_indices = @transform_3, window_bounds = array<i64: 16, 32>}]} {
    %c0 = arith.constant 0 : index
    %c0_0 = arith.constant 0 : index
    %0 = vector.load %arg1[%c0, %c0_0] : memref<16x32xf32, #tpu.memory_space<vmem>>, vector<16x32xf32>
    %cst = arith.constant dense<0.000000e+00> : vector<16xf32>
    %1 = vector.multi_reduction <add>, %0, %cst [1] : vector<16x32xf32> to vector<16xf32>
    %2 = vector.shape_cast %1 : vector<16xf32> to vector<16x1xf32>
    %cst_1 = arith.constant 3.125000e-02 : f32
    %3 = vector.broadcast %cst_1 : f32 to vector<16x1xf32>
    %4 = arith.mulf %2, %3 : vector<16x1xf32>
    %5 = vector.broadcast %4 : vector<16x1xf32> to vector<16x32xf32>
    %6 = arith.subf %0, %5 : vector<16x32xf32>
    %7 = arith.mulf %6, %6 : vector<16x32xf32>
    %cst_2 = arith.constant dense<0.000000e+00> : vector<16xf32>
    %8 = vector.multi_reduction <add>, %7, %cst_2 [1] : vector<16x32xf32> to vector<16xf32>
    %9 = vector.shape_cast %8 : vector<16xf32> to vector<16x1xf32>
    %cst_3 = arith.constant 3.100000e+01 : f32
    %10 = vector.broadcast %cst_3 : f32 to vector<16x1xf32>
    %11 = arith.divf %9, %10 : vector<16x1xf32>
    %12 = math.sqrt %11 : vector<16x1xf32>
    %cst_4 = arith.constant 9.99999997E-7 : f32
    %13 = vector.broadcast %cst_4 : f32 to vector<16x1xf32>
    %14 = arith.addf %12, %13 : vector<16x1xf32>
    %15 = tpu.reciprocal %14 : vector<16x1xf32> -> vector<16x1xf32>
    %c0_5 = arith.constant 0 : index
    %c0_6 = arith.constant 0 : index
    %16 = vector.load %arg2[%c0_5, %c0_6] : memref<1x32xf32, #tpu.memory_space<vmem>>, vector<1x32xf32>
    %c0_7 = arith.constant 0 : index
    %c0_8 = arith.constant 0 : index
    %17 = vector.load %arg3[%c0_7, %c0_8] : memref<1x32xf32, #tpu.memory_space<vmem>>, vector<1x32xf32>
    %18 = vector.broadcast %15 : vector<16x1xf32> to vector<16x32xf32>
    %19 = arith.mulf %6, %18 : vector<16x32xf32>
    %20 = vector.broadcast %16 : vector<1x32xf32> to vector<16x32xf32>
    %21 = arith.mulf %19, %20 : vector<16x32xf32>
    %22 = vector.broadcast %17 : vector<1x32xf32> to vector<16x32xf32>
    %23 = arith.addf %21, %22 : vector<16x32xf32>
    %c0_9 = arith.constant 0 : index
    %c0_10 = arith.constant 0 : index
    %24 = vector.load %arg4[%c0_9, %c0_10] : memref<16x32xf32, #tpu.memory_space<vmem>>, vector<16x32xf32>
    tpu.vector_store %arg4[%c0_9, %c0_10], %23 {strides = array<i32>} : memref<16x32xf32, #tpu.memory_space<vmem>>, vector<16x32xf32>,
    return
  }
  func.func @transform_0(%arg0: i32) -> (i32, i32) {
    %c0_i32 = arith.constant 0 : i32
    %c0_i32_0 = arith.constant 0 : i32
    return %arg0, %c0_i32 : i32, i32
  }
  func.func @transform_1(%arg0: i32) -> (i32, i32) {
    %c0_i32 = arith.constant 0 : i32
    %c0_i32_0 = arith.constant 0 : i32
    %c0_i32_1 = arith.constant 0 : i32
    return %c0_i32, %c0_i32_0 : i32, i32
  }
  func.func @transform_2(%arg0: i32) -> (i32, i32) {
    %c0_i32 = arith.constant 0 : i32
    %c0_i32_0 = arith.constant 0 : i32
    %c0_i32_1 = arith.constant 0 : i32
    return %c0_i32, %c0_i32_0 : i32, i32
  }
  func.func @transform_3(%arg0: i32) -> (i32, i32) {
    %c0_i32 = arith.constant 0 : i32
    %c0_i32_0 = arith.constant 0 : i32
    return %arg0, %c0_i32 : i32, i32
  }
}

</mosaic_0001>

<llo_original>
// kernel: tpu_custom_call.1
$region0: #{tpu_custom_call.1}
  #allocation0 [shape = 'u32[]', space=smem, size = 0x4, offset = 0x4, fixed_abs, tag = 'smem constant byte address 0x4 - core index']
  #allocation1 [shape = 'u32[144,128]{1,0:T(1,128)}', space=vmem, size = 0x12000, scoped, tag = 'internal scratch']
  %s0 = inlined_call_operand.hbm [shape: f32[16,32], index: 0, kind: input, shape index: {}]
  %s1 = inlined_call_operand.vmem [shape: f32[1,32], index: 1, kind: input, shape index: {}]
  %s2 = inlined_call_operand.vmem [shape: f32[1,32], index: 2, kind: input, shape index: {}]
  %s3 = inlined_call_operand.hbm [shape: f32[16,32], index: 3, kind: output, shape index: {}]
  %s4 = sld [smem:[#allocation0]]
  $region26: #{tpu_custom_call.1} parent=0
    _
  %s6 = ssub.s32 1, %s4
  %s7 = scalar_select 0, %s6, %s4
  $region1: #{tpu_custom_call.1} parent=0
    #allocation2 [shape = 'u8[8192]{0}', space=vmem, size = 0x2000, scoped, tag = 'input window, operand 0, single buffered']
    #allocation3 [shape = 's32[1]{0}', space=sflag, size = 0x4, scoped, tag = 'scoped memory for tpu_custom_call.1']
    #allocation4 [shape = 's32[1]{0}', space=sflag, size = 0x4, scoped, tag = 'scoped memory for tpu_custom_call.1']
    #allocation5 [shape = 'u8[8192]{0}', space=vmem, size = 0x2000, scoped, tag = 'output window, operand 0, single buffered']
    %8 = vsyncpa [#allocation3], 0
    %9 = vsyncpa [#allocation4], 0
    // Predicated region
    $region2: #{tpu_custom_call.1} parent=1 // pred_check
      _
    $region3: #{tpu_custom_call.1} parent=1 // pred_check_branch
      %11 = sbr.rel (0) target = $region5
    $region4: #{tpu_custom_call.1} parent=1 // pred_region
      %s13 = ssub.s32 256, 256
      %14 = vsyncadd [#allocation3], %s13
      %s15 = sshll.u32 [#allocation2], 4
      %s16 = int_to_ptr.vmem [resolvable:$true] %s15
      %21 = dma.hbm_to_vmem [thread:$0]  %s0, 256, %s16, [#allocation3], 128, 128, 8
    $region5: #{tpu_custom_call.1} parent=1 // pred_fallthru
      _
    // Predicated region
    $region6: #{tpu_custom_call.1} parent=1 // pred_check
      _
    $region7: #{tpu_custom_call.1} parent=1 // pred_check_branch
      %23 = sbr.rel (0) target = $region9
    $region8: #{tpu_custom_call.1} parent=1 // pred_region
      _
    $region9: #{tpu_custom_call.1} parent=1 // pred_fallthru
      _
    // Predicated region
    $region10: #{tpu_custom_call.1} parent=1 // pred_check
      _
    $region11: #{tpu_custom_call.1} parent=1 // pred_check_branch
      %25 = sbr.rel (0) target = $region13
    $region12: #{tpu_custom_call.1} parent=1 // pred_region
      _
    $region13: #{tpu_custom_call.1} parent=1 // pred_fallthru
      _
    // Predicated region
    $region14: #{tpu_custom_call.1} parent=1 // pred_check
      _
    $region15: #{tpu_custom_call.1} parent=1 // pred_check_branch
      %27 = sbr.rel (0) target = $region17
    $region16: #{tpu_custom_call.1} parent=1 // pred_region
      %28 = dma.done [#allocation3], 256
    $region17: #{tpu_custom_call.1} parent=1 // pred_fallthru
      _
    %v29 = vld [vmem:[#allocation2] sm:$0xff]
    %v30 = vld [vmem:[#allocation2 + $0x8] sm:$0xff]
    %vm31 = vcmask 261120
    %v32 = vsel %vm31, %v29, 0.0
    %33 = vadd.xlane.f32.xlu0 %v32
    %v34 = vpop.xlane.xlu0 %33
    %v35 = vsel %vm31, %v30, 0.0
    %36 = vadd.xlane.f32.xlu0 %v35
    %v37 = vpop.xlane.xlu0 %36
    %v38 = vmul.f32 %v34, 0.03125
    %v39 = vmul.f32 %v37, 0.03125
    %v40 = vsub.f32 %v29, %v38
    %v41 = vsub.f32 %v30, %v39
    %v42 = vmul.f32 %v40, %v40
    %v43 = vmul.f32 %v41, %v41
    %v44 = vsel %vm31, %v42, 0.0
    %45 = vadd.xlane.f32.xlu0 %v44
    %v46 = vpop.xlane.xlu0 %45
    %v47 = vsel %vm31, %v43, 0.0
    %48 = vadd.xlane.f32.xlu0 %v47
    %v49 = vpop.xlane.xlu0 %48
    %v50 = vrcp.pop 31.0
    %v51 = vmul.f32 %v46, %v50
    %v52 = vmul.f32 %v49, %v50
    %v53 = vrsqrt.pop %v51
    %v54 = vmul.f32 %v51, %v53
    %vm55 = vcmp.eq.f32.partialorder %v51, inf
    %v56 = vsel %vm55, %v51, %v54
    %vm57 = vcmp.eq.f32.partialorder %v51, 0.0
    %v58 = vand.u32 %v51, 2147483648
    %v59 = vsel %vm57, %v58, %v56
    %v60 = vrsqrt.pop %v52
    %v61 = vmul.f32 %v52, %v60
    %vm62 = vcmp.eq.f32.partialorder %v52, inf
    %v63 = vsel %vm62, %v52, %v61
    %vm64 = vcmp.eq.f32.partialorder %v52, 0.0
    %v65 = vand.u32 %v52, 2147483648
    %v66 = vsel %vm64, %v65, %v63
    %v67 = vadd.f32 %v59, 1e-06
    %v68 = vadd.f32 %v66, 1e-06
    %v69 = vrcp.pop %v67
    %v70 = vrcp.pop %v68
    %v71 = vld [vmem:[%s1] sm:$0x1]
    %v72 = vld [vmem:[%s2] sm:$0x1]
    %v73 = vmul.f32 %v40, %v69
    %v74 = vmul.f32 %v41, %v70
    %v76 = vlaneseq
    %v77 = vshrl.u32 %v76, 7
    %v78 = vsub.s32 0, %v77
    %v79 = vrot.slane %v71, %v78
    %v81 = vmul.f32 %v73, %v79
    %v82 = vmul.f32 %v74, %v79
    %v84 = vlaneseq
    %v85 = vshrl.u32 %v84, 7
    %v86 = vsub.s32 0, %v85
    %v87 = vrot.slane %v72, %v86
    %v89 = vadd.f32 %v81, %v87
    %v90 = vadd.f32 %v82, %v87
    %91 = vst.msk [vmem:[#allocation5] sm:$0xff] %vm31, %v89
    %92 = vst.msk [vmem:[#allocation5 + $0x8] sm:$0xff] %vm31, %v90
    // Predicated region
    $region18: #{tpu_custom_call.1} parent=1 // pred_check
      _
    $region19: #{tpu_custom_call.1} parent=1 // pred_check_branch
      %94 = sbr.rel (0) target = $region21
    $region20: #{tpu_custom_call.1} parent=1 // pred_region
      %s96 = ssub.s32 256, 256
      %97 = vsyncadd [#allocation4], %s96
      %s98 = sshll.u32 [#allocation5], 4
      %s99 = int_to_ptr.vmem [resolvable:$true] %s98
      %104 = dma.vmem_to_hbm [thread:$0]  %s99, 256, %s3, [#allocation4], 128, 128, 8
    $region21: #{tpu_custom_call.1} parent=1 // pred_fallthru
      _
    // Predicated region
    $region22: #{tpu_custom_call.1} parent=1 // pred_check
      _
    $region23: #{tpu_custom_call.1} parent=1 // pred_check_branch
      %106 = sbr.rel (0) target = $region25
    $region24: #{tpu_custom_call.1} parent=1 // pred_region
      %107 = dma.done [#allocation4], 256
    $region25: #{tpu_custom_call.1} parent=1 // pred_fallthru
      _
    %108 = vsyncpa [#allocation3], 1
    %109 = vsyncpa [#allocation4], 1

</llo_original>
